<compile_context>
chip_gen: v7x
topology: tpu7x:2x2x1
jax: 0.10.0
libtpu: 0.0.40
codegen_flags: <defaults>
</compile_context>

<pallas_src>
import functools
import math

import jax
import jax.numpy as jnp
from jax import lax
from jax.experimental import pallas as pl
from jax.experimental.pallas import tpu as pltpu


def _cosine_sim_kernel(h1_ref, h2_ref, o_ref, *, temperature: float, eps: float):
    # h1_ref/h2_ref: (TR, D) tiles; o_ref: (1, TR) lane-dense output row.
    x = h1_ref[...].astype(jnp.float32)
    y = h2_ref[...].astype(jnp.float32)

    dot = jnp.sum(x * y, axis=-1, keepdims=True)   # (TR, 1)
    nx2 = jnp.sum(x * x, axis=-1, keepdims=True)   # (TR, 1)
    ny2 = jnp.sum(y * y, axis=-1, keepdims=True)   # (TR, 1)

    # max(sqrt(a), eps) == sqrt(max(a, eps^2)); rsqrt lowers to the (idle) EUP.
    eps2 = eps * eps
    inv_norm = lax.rsqrt(jnp.maximum(nx2, eps2)) * lax.rsqrt(jnp.maximum(ny2, eps2))
    out = dot * inv_norm * (1.0 / temperature)     # (TR, 1)

    # (TR, 1) -> (1, TR): lane-dense, full-width store (XLU relayout).
    o_ref[...] = out.reshape(o_ref.shape).astype(o_ref.dtype)


def _round_up(x: int, m: int) -> int:
    return ((x + m - 1) // m) * m


def _cdiv(a: int, b: int) -> int:
    return -(-a // b)


def _vmem_capacity_bytes() -> int:
    """Physical per-core VMEM; conservative fallback if the query is unavailable."""
    try:
        info = pltpu.get_tpu_info()
        cap = getattr(info, "vmem_capacity_bytes", None)
        if cap:
            return int(cap)
    except Exception:
        pass
    return 64 * 1024 * 1024  # conservative: v7x per-TensorCore VMEM


def _pick_tiling(rows: int, d: int, in_itemsize: int, out_itemsize: int):
    """Choose (row tile TR, scoped vmem limit) per TPU generation."""
    vmem_phys = _vmem_capacity_bytes()
    # Raised scoped limit: ~48 MiB on v7x (64 MiB phys), ~96 MiB on v5e/v6e (128 MiB).
    vmem_limit = min((vmem_phys * 3) // 4, 96 * 1024 * 1024)
    tile_budget = vmem_limit - 6 * 1024 * 1024       # fixed headroom, no //2 discount

    d_lanes = _round_up(max(d, 1), 128)              # VMEM lane padding of the last dim
    # 2 inputs x 2 pipeline buffers (actual input dtype, lane-padded)
    # + ~5 f32 (TR, d_lanes) in-kernel temporaries (casts + the three products)
    # + double-buffered (1, TR) output.
    bytes_per_row = 2 * 2 * d_lanes * in_itemsize + 5 * d_lanes * 4 + 2 * out_itemsize
    tr_budget = max(128, (tile_budget // bytes_per_row) // 128 * 128)

    # Bandwidth target: each grid step should move >= ~4 MiB of input bytes
    # (and >= 1024 rows) to amortize the ~0.35us per-step overhead.
    step_bytes = 4 * 1024 * 1024
    tr_bw = _round_up(max(1, step_bytes // max(1, 2 * d * in_itemsize)), 128)
    tr = min(tr_budget, max(tr_bw, 1024))

    if rows >= 256:
        # Keep >= 2 grid steps so ("parallel",) can shard across v7x's 2 TensorCores.
        tr = min(tr, _round_up(_cdiv(rows, 2), 128))
    tr = min(tr, _round_up(max(rows, 1), 128))       # don't over-pad tiny problems
    return max(tr, 128), vmem_limit


def cosine_similarity(h_1: jax.Array, h_2: jax.Array, temperature: float) -> jax.Array:
    """Cosine similarity over the last dim, divided by temperature.

    h_1, h_2: same shape (..., D). Returns shape (...,).
    """
    assert h_1.shape == h_2.shape, "h_1 and h_2 must have the same shape"
    *lead, D = h_1.shape
    rows = math.prod(lead) if lead else 1
    out_dtype = h_1.dtype

    if rows == 0:  # empty leading dims: nothing to compute
        return jnp.zeros(tuple(lead), dtype=out_dtype)

    # Free metadata reshapes (contiguous row-major): no HBM copy.
    x = h_1.reshape(rows, D)
    y = h_2.reshape(rows, D)

    in_itemsize = int(jnp.dtype(x.dtype).itemsize)
    out_itemsize = int(jnp.dtype(out_dtype).itemsize)
    TR, vmem_limit = _pick_tiling(rows, D, in_itemsize, out_itemsize)
    num_tiles = _cdiv(rows, TR)
    rows_padded = num_tiles * TR   # only the tiny output is padded; inputs stay ragged

    kernel = functools.partial(
        _cosine_sim_kernel, temperature=float(temperature), eps=1e-8
    )

    cost = pl.CostEstimate(
        flops=6 * rows * D,
        transcendentals=2 * rows,
        bytes_accessed=2 * rows * D * in_itemsize + rows * out_itemsize,
    )

    out = pl.pallas_call(
        kernel,
        out_shape=jax.ShapeDtypeStruct((1, rows_padded), out_dtype),
        grid_spec=pltpu.PrefetchScalarGridSpec(
            num_scalar_prefetch=0,
            grid=(num_tiles,),
            in_specs=[
                pl.BlockSpec((TR, D), lambda i: (i, 0)),
                pl.BlockSpec((TR, D), lambda i: (i, 0)),
            ],
            out_specs=pl.BlockSpec((1, TR), lambda i: (0, i)),
        ),
        compiler_params=pltpu.CompilerParams(
            dimension_semantics=("parallel",),   # shards row tiles across v7x's 2 TCs
            vmem_limit_bytes=int(vmem_limit),
        ),
        cost_estimate=cost,
    )(x, y)

    out = out.reshape(rows_padded)[:rows]
    return out.reshape(tuple(lead)) if lead else out.reshape(())


if __name__ == "__main__":
    key = jax.random.PRNGKey(0)
    k1, k2 = jax.random.split(key)

    B, N, D = 2, 8, 32          # (batch, nodes, hidden)
    temperature = 0.5

    h_1 = jax.random.normal(k1, (B, N, D), dtype=jnp.float32)
    h_2 = jax.random.normal(k2, (B, N, D), dtype=jnp.float32)

    out = cosine_similarity(h_1, h_2, temperature)
    out = jax.block_until_ready(out)

    # Reference in plain JAX (matches torch.nn.CosineSimilarity(dim=-1) / T).
    dot = jnp.sum(h_1 * h_2, axis=-1)
    denom = jnp.maximum(jnp.linalg.norm(h_1, axis=-1), 1e-8) * jnp.maximum(
        jnp.linalg.norm(h_2, axis=-1), 1e-8
    )
    ref = dot / denom / temperature

    assert out.shape == (B, N)
    assert jnp.allclose(out, ref, atol=1e-5, rtol=1e-5)

    print("KERNEL_OK")
</pallas_src>

<mosaic_0001>
module attributes {stable_mosaic.version = 11 : i64} {
  func.func @_cosine_sim_kernel(%arg0: i32, %arg1: memref<128x32xf32, #tpu.memory_space<vmem>>, %arg2: memref<128x32xf32, #tpu.memory_space<vmem>>, %arg3: memref<1x128xf32, #tpu.memory_space<vmem>>) attributes {dimension_semantics = [#tpu.dimension_semantics<parallel>], iteration_bounds = array<i64: 1>, scalar_prefetch = 0 : i64, scratch_operands = 0 : i64, tpu.core_type = #tpu.core_type<tc>, window_params = [{transform_indices = @transform_0, window_bounds = array<i64: 128, 32>}, {transform_indices = @transform_1, window_bounds = array<i64: 128, 32>}, {transform_indices = @transform_2, window_bounds = array<i64: 1, 128>}]} {
    %c0 = arith.constant 0 : index
    %c0_0 = arith.constant 0 : index
    %0 = vector.load %arg1[%c0, %c0_0] : memref<128x32xf32, #tpu.memory_space<vmem>>, vector<128x32xf32>
    %c0_1 = arith.constant 0 : index
    %c0_2 = arith.constant 0 : index
    %1 = vector.load %arg2[%c0_1, %c0_2] : memref<128x32xf32, #tpu.memory_space<vmem>>, vector<128x32xf32>
    %2 = arith.mulf %0, %1 : vector<128x32xf32>
    %cst = arith.constant dense<0.000000e+00> : vector<128xf32>
    %3 = vector.multi_reduction <add>, %2, %cst [1] : vector<128x32xf32> to vector<128xf32>
    %4 = vector.shape_cast %3 : vector<128xf32> to vector<128x1xf32>
    %5 = arith.mulf %0, %0 : vector<128x32xf32>
    %cst_3 = arith.constant dense<0.000000e+00> : vector<128xf32>
    %6 = vector.multi_reduction <add>, %5, %cst_3 [1] : vector<128x32xf32> to vector<128xf32>
    %7 = vector.shape_cast %6 : vector<128xf32> to vector<128x1xf32>
    %8 = arith.mulf %1, %1 : vector<128x32xf32>
    %cst_4 = arith.constant dense<0.000000e+00> : vector<128xf32>
    %9 = vector.multi_reduction <add>, %8, %cst_4 [1] : vector<128x32xf32> to vector<128xf32>
    %10 = vector.shape_cast %9 : vector<128xf32> to vector<128x1xf32>
    %cst_5 = arith.constant 1.000000e-16 : f32
    %11 = vector.broadcast %cst_5 : f32 to vector<128x1xf32>
    %12 = arith.maximumf %7, %11 : vector<128x1xf32>
    %13 = math.rsqrt %12 : vector<128x1xf32>
    %cst_6 = arith.constant 1.000000e-16 : f32
    %14 = vector.broadcast %cst_6 : f32 to vector<128x1xf32>
    %15 = arith.maximumf %10, %14 : vector<128x1xf32>
    %16 = math.rsqrt %15 : vector<128x1xf32>
    %17 = arith.mulf %13, %16 : vector<128x1xf32>
    %18 = arith.mulf %4, %17 : vector<128x1xf32>
    %cst_7 = arith.constant 2.000000e+00 : f32
    %19 = vector.broadcast %cst_7 : f32 to vector<128x1xf32>
    %20 = arith.mulf %18, %19 : vector<128x1xf32>
    %21 = vector.shape_cast %20 : vector<128x1xf32> to vector<1x128xf32>
    %c0_8 = arith.constant 0 : index
    %c0_9 = arith.constant 0 : index
    %22 = vector.load %arg3[%c0_8, %c0_9] : memref<1x128xf32, #tpu.memory_space<vmem>>, vector<1x128xf32>
    tpu.vector_store %arg3[%c0_8, %c0_9], %21 {strides = array<i32>} : memref<1x128xf32, #tpu.memory_space<vmem>>, vector<1x128xf32>,
    return
  }
  func.func @transform_0(%arg0: i32) -> (i32, i32) {
    %c0_i32 = arith.constant 0 : i32
    %c0_i32_0 = arith.constant 0 : i32
    return %arg0, %c0_i32 : i32, i32
  }
  func.func @transform_1(%arg0: i32) -> (i32, i32) {
    %c0_i32 = arith.constant 0 : i32
    %c0_i32_0 = arith.constant 0 : i32
    return %arg0, %c0_i32 : i32, i32
  }
  func.func @transform_2(%arg0: i32) -> (i32, i32) {
    %c0_i32 = arith.constant 0 : i32
    %c0_i32_0 = arith.constant 0 : i32
    return %c0_i32, %arg0 : i32, i32
  }
}

</mosaic_0001>

<llo_original>
// kernel: tpu_custom_call.1
$region0: #{tpu_custom_call.1}
  #allocation0 [shape = 'u32[]', space=smem, size = 0x4, offset = 0x4, fixed_abs, tag = 'smem constant byte address 0x4 - core index']
  #allocation1 [shape = 'u32[144,128]{1,0:T(1,128)}', space=vmem, size = 0x12000, scoped, tag = 'internal scratch']
  %s0 = inlined_call_operand.hbm [shape: f32[16,32], index: 0, kind: input, shape index: {}]
  %s1 = inlined_call_operand.hbm [shape: f32[16,32], index: 1, kind: input, shape index: {}]
  %s2 = inlined_call_operand.hbm [shape: f32[1,128], index: 2, kind: output, shape index: {}]
  %s3 = sld [smem:[#allocation0]]
  $region26: #{tpu_custom_call.1} parent=0
    _
  %s5 = ssub.s32 1, %s3
  %s6 = scalar_select 0, %s5, %s3
  $region1: #{tpu_custom_call.1} parent=0
    #allocation2 [shape = 'u8[65536]{0}', space=vmem, size = 0x10000, scoped, tag = 'input window, operand 0, single buffered']
    #allocation3 [shape = 's32[1]{0}', space=sflag, size = 0x4, scoped, tag = 'scoped memory for tpu_custom_call.1']
    #allocation4 [shape = 's32[1]{0}', space=sflag, size = 0x4, scoped, tag = 'scoped memory for tpu_custom_call.1']
    #allocation5 [shape = 'u8[65536]{0}', space=vmem, size = 0x10000, scoped, tag = 'input window, operand 1, single buffered']
    #allocation6 [shape = 's32[1]{0}', space=sflag, size = 0x4, scoped, tag = 'scoped memory for tpu_custom_call.1']
    #allocation7 [shape = 'u8[512]{0}', space=vmem, size = 0x400, scoped, tag = 'output window, operand 0, single buffered']
    %7 = vsyncpa [#allocation3], 0
    %8 = vsyncpa [#allocation6], 0
    %9 = vsyncpa [#allocation4], 0
    // Predicated region
    $region2: #{tpu_custom_call.1} parent=1 // pred_check
      _
    $region3: #{tpu_custom_call.1} parent=1 // pred_check_branch
      %11 = sbr.rel (0) target = $region5
    $region4: #{tpu_custom_call.1} parent=1 // pred_region
      %s13 = ssub.s32 2048, 256
      %14 = vsyncadd [#allocation3], %s13
      %s15 = sshll.u32 [#allocation2], 4
      %s16 = int_to_ptr.vmem [resolvable:$true] %s15
      %21 = dma.hbm_to_vmem [thread:$0]  %s0, 256, %s16, [#allocation3], 128, 128, 8
    $region5: #{tpu_custom_call.1} parent=1 // pred_fallthru
      _
    // Predicated region
    $region6: #{tpu_custom_call.1} parent=1 // pred_check
      _
    $region7: #{tpu_custom_call.1} parent=1 // pred_check_branch
      %23 = sbr.rel (0) target = $region9
    $region8: #{tpu_custom_call.1} parent=1 // pred_region
      %s25 = ssub.s32 2048, 256
      %26 = vsyncadd [#allocation6], %s25
      %s27 = sshll.u32 [#allocation5], 4
      %s28 = int_to_ptr.vmem [resolvable:$true] %s27
      %33 = dma.hbm_to_vmem [thread:$0]  %s1, 256, %s28, [#allocation6], 128, 128, 8
    $region9: #{tpu_custom_call.1} parent=1 // pred_fallthru
      _
    // Predicated region
    $region10: #{tpu_custom_call.1} parent=1 // pred_check
      _
    $region11: #{tpu_custom_call.1} parent=1 // pred_check_branch
      %35 = sbr.rel (0) target = $region13
    $region12: #{tpu_custom_call.1} parent=1 // pred_region
      %36 = dma.done [#allocation3], 2048
    $region13: #{tpu_custom_call.1} parent=1 // pred_fallthru
      _
    // Predicated region
    $region14: #{tpu_custom_call.1} parent=1 // pred_check
      _
    $region15: #{tpu_custom_call.1} parent=1 // pred_check_branch
      %38 = sbr.rel (0) target = $region17
    $region16: #{tpu_custom_call.1} parent=1 // pred_region
      %39 = dma.done [#allocation6], 2048
    $region17: #{tpu_custom_call.1} parent=1 // pred_fallthru
      _
    %v40 = vld [vmem:[#allocation2] sm:$0xff]
    %v41 = vld [vmem:[#allocation2 + $0x8] sm:$0xff]
    %v42 = vld [vmem:[#allocation2 + $0x10] sm:$0xff]
    %v43 = vld [vmem:[#allocation2 + $0x18] sm:$0xff]
    %v44 = vld [vmem:[#allocation2 + $0x20] sm:$0xff]
    %v45 = vld [vmem:[#allocation2 + $0x28] sm:$0xff]
    %v46 = vld [vmem:[#allocation2 + $0x30] sm:$0xff]
    %v47 = vld [vmem:[#allocation2 + $0x38] sm:$0xff]
    %v48 = vld [vmem:[#allocation2 + $0x40] sm:$0xff]
    %v49 = vld [vmem:[#allocation2 + $0x48] sm:$0xff]
    %v50 = vld [vmem:[#allocation2 + $0x50] sm:$0xff]
    %v51 = vld [vmem:[#allocation2 + $0x58] sm:$0xff]
    %v52 = vld [vmem:[#allocation2 + $0x60] sm:$0xff]
    %v53 = vld [vmem:[#allocation2 + $0x68] sm:$0xff]
    %v54 = vld [vmem:[#allocation2 + $0x70] sm:$0xff]
    %v55 = vld [vmem:[#allocation2 + $0x78] sm:$0xff]
    %v56 = vld [vmem:[#allocation5] sm:$0xff]
    %v57 = vld [vmem:[#allocation5 + $0x8] sm:$0xff]
    %v58 = vld [vmem:[#allocation5 + $0x10] sm:$0xff]
    %v59 = vld [vmem:[#allocation5 + $0x18] sm:$0xff]
    %v60 = vld [vmem:[#allocation5 + $0x20] sm:$0xff]
    %v61 = vld [vmem:[#allocation5 + $0x28] sm:$0xff]
    %v62 = vld [vmem:[#allocation5 + $0x30] sm:$0xff]
    %v63 = vld [vmem:[#allocation5 + $0x38] sm:$0xff]
    %v64 = vld [vmem:[#allocation5 + $0x40] sm:$0xff]
    %v65 = vld [vmem:[#allocation5 + $0x48] sm:$0xff]
    %v66 = vld [vmem:[#allocation5 + $0x50] sm:$0xff]
    %v67 = vld [vmem:[#allocation5 + $0x58] sm:$0xff]
    %v68 = vld [vmem:[#allocation5 + $0x60] sm:$0xff]
    %v69 = vld [vmem:[#allocation5 + $0x68] sm:$0xff]
    %v70 = vld [vmem:[#allocation5 + $0x70] sm:$0xff]
    %v71 = vld [vmem:[#allocation5 + $0x78] sm:$0xff]
    %v72 = vmul.f32 %v40, %v56
    %v73 = vmul.f32 %v41, %v57
    %v74 = vmul.f32 %v42, %v58
    %v75 = vmul.f32 %v43, %v59
    %v76 = vmul.f32 %v44, %v60
    %v77 = vmul.f32 %v45, %v61
    %v78 = vmul.f32 %v46, %v62
    %v79 = vmul.f32 %v47, %v63
    %v80 = vmul.f32 %v48, %v64
    %v81 = vmul.f32 %v49, %v65
    %v82 = vmul.f32 %v50, %v66
    %v83 = vmul.f32 %v51, %v67
    %v84 = vmul.f32 %v52, %v68
    %v85 = vmul.f32 %v53, %v69
    %v86 = vmul.f32 %v54, %v70
    %v87 = vmul.f32 %v55, %v71
    %vm88 = vcmask 261120
    %v89 = vsel %vm88, %v72, 0.0
    %90 = vadd.xlane.f32.xlu0 %v89
    %v91 = vpop.xlane.xlu0 %90
    %v92 = vsel %vm88, %v73, 0.0
    %93 = vadd.xlane.f32.xlu0 %v92
    %v94 = vpop.xlane.xlu0 %93
    %v95 = vsel %vm88, %v74, 0.0
    %96 = vadd.xlane.f32.xlu0 %v95
    %v97 = vpop.xlane.xlu0 %96
    %v98 = vsel %vm88, %v75, 0.0
    %99 = vadd.xlane.f32.xlu0 %v98
    %v100 = vpop.xlane.xlu0 %99
    %v101 = vsel %vm88, %v76, 0.0
    %102 = vadd.xlane.f32.xlu0 %v101
    %v103 = vpop.xlane.xlu0 %102
    %v104 = vsel %vm88, %v77, 0.0
    %105 = vadd.xlane.f32.xlu0 %v104
    %v106 = vpop.xlane.xlu0 %105
    %v107 = vsel %vm88, %v78, 0.0
    %108 = vadd.xlane.f32.xlu0 %v107
    %v109 = vpop.xlane.xlu0 %108
    %v110 = vsel %vm88, %v79, 0.0
    %111 = vadd.xlane.f32.xlu0 %v110
    %v112 = vpop.xlane.xlu0 %111
    %v113 = vsel %vm88, %v80, 0.0
    %114 = vadd.xlane.f32.xlu0 %v113
    %v115 = vpop.xlane.xlu0 %114
    %v116 = vsel %vm88, %v81, 0.0
    %117 = vadd.xlane.f32.xlu0 %v116
    %v118 = vpop.xlane.xlu0 %117
    %v119 = vsel %vm88, %v82, 0.0
    %120 = vadd.xlane.f32.xlu0 %v119
    %v121 = vpop.xlane.xlu0 %120
    %v122 = vsel %vm88, %v83, 0.0
    %123 = vadd.xlane.f32.xlu0 %v122
    %v124 = vpop.xlane.xlu0 %123
    %v125 = vsel %vm88, %v84, 0.0
    %126 = vadd.xlane.f32.xlu0 %v125
    %v127 = vpop.xlane.xlu0 %126
    %v128 = vsel %vm88, %v85, 0.0
    %129 = vadd.xlane.f32.xlu0 %v128
    %v130 = vpop.xlane.xlu0 %129
    %v131 = vsel %vm88, %v86, 0.0
    %132 = vadd.xlane.f32.xlu0 %v131
    %v133 = vpop.xlane.xlu0 %132
    %v134 = vsel %vm88, %v87, 0.0
    %135 = vadd.xlane.f32.xlu0 %v134
    %v136 = vpop.xlane.xlu0 %135
    %v137 = vmul.f32 %v40, %v40
    %v138 = vmul.f32 %v41, %v41
    %v139 = vmul.f32 %v42, %v42
    %v140 = vmul.f32 %v43, %v43
    %v141 = vmul.f32 %v44, %v44
    %v142 = vmul.f32 %v45, %v45
    %v143 = vmul.f32 %v46, %v46
    %v144 = vmul.f32 %v47, %v47
    %v145 = vmul.f32 %v48, %v48
    %v146 = vmul.f32 %v49, %v49
    %v147 = vmul.f32 %v50, %v50
    %v148 = vmul.f32 %v51, %v51
    %v149 = vmul.f32 %v52, %v52
    %v150 = vmul.f32 %v53, %v53
    %v151 = vmul.f32 %v54, %v54
    %v152 = vmul.f32 %v55, %v55
    %v153 = vsel %vm88, %v137, 0.0
    %154 = vadd.xlane.f32.xlu0 %v153
    %v155 = vpop.xlane.xlu0 %154
    %v156 = vsel %vm88, %v138, 0.0
    %157 = vadd.xlane.f32.xlu0 %v156
    %v158 = vpop.xlane.xlu0 %157
    %v159 = vsel %vm88, %v139, 0.0
    %160 = vadd.xlane.f32.xlu0 %v159
    %v161 = vpop.xlane.xlu0 %160
    %v162 = vsel %vm88, %v140, 0.0
    %163 = vadd.xlane.f32.xlu0 %v162
    %v164 = vpop.xlane.xlu0 %163
    %v165 = vsel %vm88, %v141, 0.0
    %166 = vadd.xlane.f32.xlu0 %v165
    %v167 = vpop.xlane.xlu0 %166
    %v168 = vsel %vm88, %v142, 0.0
    %169 = vadd.xlane.f32.xlu0 %v168
    %v170 = vpop.xlane.xlu0 %169
    %v171 = vsel %vm88, %v143, 0.0
    %172 = vadd.xlane.f32.xlu0 %v171
    %v173 = vpop.xlane.xlu0 %172
    %v174 = vsel %vm88, %v144, 0.0
    %175 = vadd.xlane.f32.xlu0 %v174
    %v176 = vpop.xlane.xlu0 %175
    %v177 = vsel %vm88, %v145, 0.0
    %178 = vadd.xlane.f32.xlu0 %v177
    %v179 = vpop.xlane.xlu0 %178
    %v180 = vsel %vm88, %v146, 0.0
    %181 = vadd.xlane.f32.xlu0 %v180
    %v182 = vpop.xlane.xlu0 %181
    %v183 = vsel %vm88, %v147, 0.0
    %184 = vadd.xlane.f32.xlu0 %v183
    %v185 = vpop.xlane.xlu0 %184
    %v186 = vsel %vm88, %v148, 0.0
    %187 = vadd.xlane.f32.xlu0 %v186
    %v188 = vpop.xlane.xlu0 %187
    %v189 = vsel %vm88, %v149, 0.0
    %190 = vadd.xlane.f32.xlu0 %v189
    %v191 = vpop.xlane.xlu0 %190
    %v192 = vsel %vm88, %v150, 0.0
    %193 = vadd.xlane.f32.xlu0 %v192
    %v194 = vpop.xlane.xlu0 %193
    %v195 = vsel %vm88, %v151, 0.0
    %196 = vadd.xlane.f32.xlu0 %v195
    %v197 = vpop.xlane.xlu0 %196
    %v198 = vsel %vm88, %v152, 0.0
    %199 = vadd.xlane.f32.xlu0 %v198
    %v200 = vpop.xlane.xlu0 %199
    %v201 = vmul.f32 %v56, %v56
    %v202 = vmul.f32 %v57, %v57
    %v203 = vmul.f32 %v58, %v58
    %v204 = vmul.f32 %v59, %v59
    %v205 = vmul.f32 %v60, %v60
    %v206 = vmul.f32 %v61, %v61
    %v207 = vmul.f32 %v62, %v62
    %v208 = vmul.f32 %v63, %v63
    %v209 = vmul.f32 %v64, %v64
    %v210 = vmul.f32 %v65, %v65
    %v211 = vmul.f32 %v66, %v66
    %v212 = vmul.f32 %v67, %v67
    %v213 = vmul.f32 %v68, %v68
    %v214 = vmul.f32 %v69, %v69
    %v215 = vmul.f32 %v70, %v70
    %v216 = vmul.f32 %v71, %v71
    %v217 = vsel %vm88, %v201, 0.0
    %218 = vadd.xlane.f32.xlu0 %v217
    %v219 = vpop.xlane.xlu0 %218
    %v220 = vsel %vm88, %v202, 0.0
    %221 = vadd.xlane.f32.xlu0 %v220
    %v222 = vpop.xlane.xlu0 %221
    %v223 = vsel %vm88, %v203, 0.0
    %224 = vadd.xlane.f32.xlu0 %v223
    %v225 = vpop.xlane.xlu0 %224
    %v226 = vsel %vm88, %v204, 0.0
    %227 = vadd.xlane.f32.xlu0 %v226
    %v228 = vpop.xlane.xlu0 %227
    %v229 = vsel %vm88, %v205, 0.0
    %230 = vadd.xlane.f32.xlu0 %v229
    %v231 = vpop.xlane.xlu0 %230
    %v232 = vsel %vm88, %v206, 0.0
    %233 = vadd.xlane.f32.xlu0 %v232
    %v234 = vpop.xlane.xlu0 %233
    %v235 = vsel %vm88, %v207, 0.0
    %236 = vadd.xlane.f32.xlu0 %v235
    %v237 = vpop.xlane.xlu0 %236
    %v238 = vsel %vm88, %v208, 0.0
    %239 = vadd.xlane.f32.xlu0 %v238
    %v240 = vpop.xlane.xlu0 %239
    %v241 = vsel %vm88, %v209, 0.0
    %242 = vadd.xlane.f32.xlu0 %v241
    %v243 = vpop.xlane.xlu0 %242
    %v244 = vsel %vm88, %v210, 0.0
    %245 = vadd.xlane.f32.xlu0 %v244
    %v246 = vpop.xlane.xlu0 %245
    %v247 = vsel %vm88, %v211, 0.0
    %248 = vadd.xlane.f32.xlu0 %v247
    %v249 = vpop.xlane.xlu0 %248
    %v250 = vsel %vm88, %v212, 0.0
    %251 = vadd.xlane.f32.xlu0 %v250
    %v252 = vpop.xlane.xlu0 %251
    %v253 = vsel %vm88, %v213, 0.0
    %254 = vadd.xlane.f32.xlu0 %v253
    %v255 = vpop.xlane.xlu0 %254
    %v256 = vsel %vm88, %v214, 0.0
    %257 = vadd.xlane.f32.xlu0 %v256
    %v258 = vpop.xlane.xlu0 %257
    %v259 = vsel %vm88, %v215, 0.0
    %260 = vadd.xlane.f32.xlu0 %v259
    %v261 = vpop.xlane.xlu0 %260
    %v262 = vsel %vm88, %v216, 0.0
    %263 = vadd.xlane.f32.xlu0 %v262
    %v264 = vpop.xlane.xlu0 %263
    %v265 = vmax.f32 %v155, 1e-16
    %v266 = vmax.f32 %v158, 1e-16
    %v267 = vmax.f32 %v161, 1e-16
    %v268 = vmax.f32 %v164, 1e-16
    %v269 = vmax.f32 %v167, 1e-16
    %v270 = vmax.f32 %v170, 1e-16
    %v271 = vmax.f32 %v173, 1e-16
    %v272 = vmax.f32 %v176, 1e-16
    %v273 = vmax.f32 %v179, 1e-16
    %v274 = vmax.f32 %v182, 1e-16
    %v275 = vmax.f32 %v185, 1e-16
    %v276 = vmax.f32 %v188, 1e-16
    %v277 = vmax.f32 %v191, 1e-16
    %v278 = vmax.f32 %v194, 1e-16
    %v279 = vmax.f32 %v197, 1e-16
    %v280 = vmax.f32 %v200, 1e-16
    %v281 = vrsqrt.pop %v265
    %v282 = vrsqrt.pop %v266
    %v283 = vrsqrt.pop %v267
    %v284 = vrsqrt.pop %v268
    %v285 = vrsqrt.pop %v269
    %v286 = vrsqrt.pop %v270
    %v287 = vrsqrt.pop %v271
    %v288 = vrsqrt.pop %v272
    %v289 = vrsqrt.pop %v273
    %v290 = vrsqrt.pop %v274
    %v291 = vrsqrt.pop %v275
    %v292 = vrsqrt.pop %v276
    %v293 = vrsqrt.pop %v277
    %v294 = vrsqrt.pop %v278
    %v295 = vrsqrt.pop %v279
    %v296 = vrsqrt.pop %v280
    %v297 = vmax.f32 %v219, 1e-16
    %v298 = vmax.f32 %v222, 1e-16
    %v299 = vmax.f32 %v225, 1e-16
    %v300 = vmax.f32 %v228, 1e-16
    %v301 = vmax.f32 %v231, 1e-16
    %v302 = vmax.f32 %v234, 1e-16
    %v303 = vmax.f32 %v237, 1e-16
    %v304 = vmax.f32 %v240, 1e-16
    %v305 = vmax.f32 %v243, 1e-16
    %v306 = vmax.f32 %v246, 1e-16
    %v307 = vmax.f32 %v249, 1e-16
    %v308 = vmax.f32 %v252, 1e-16
    %v309 = vmax.f32 %v255, 1e-16
    %v310 = vmax.f32 %v258, 1e-16
    %v311 = vmax.f32 %v261, 1e-16
    %v312 = vmax.f32 %v264, 1e-16
    %v313 = vrsqrt.pop %v297
    %v314 = vrsqrt.pop %v298
    %v315 = vrsqrt.pop %v299
    %v316 = vrsqrt.pop %v300
    %v317 = vrsqrt.pop %v301
    %v318 = vrsqrt.pop %v302
    %v319 = vrsqrt.pop %v303
    %v320 = vrsqrt.pop %v304
    %v321 = vrsqrt.pop %v305
    %v322 = vrsqrt.pop %v306
    %v323 = vrsqrt.pop %v307
    %v324 = vrsqrt.pop %v308
    %v325 = vrsqrt.pop %v309
    %v326 = vrsqrt.pop %v310
    %v327 = vrsqrt.pop %v311
    %v328 = vrsqrt.pop %v312
    %v329 = vmul.f32 %v281, %v313
    %v330 = vmul.f32 %v282, %v314
    %v331 = vmul.f32 %v283, %v315
    %v332 = vmul.f32 %v284, %v316
    %v333 = vmul.f32 %v285, %v317
    %v334 = vmul.f32 %v286, %v318
    %v335 = vmul.f32 %v287, %v319
    %v336 = vmul.f32 %v288, %v320
    %v337 = vmul.f32 %v289, %v321
    %v338 = vmul.f32 %v290, %v322
    %v339 = vmul.f32 %v291, %v323
    %v340 = vmul.f32 %v292, %v324
    %v341 = vmul.f32 %v293, %v325
    %v342 = vmul.f32 %v294, %v326
    %v343 = vmul.f32 %v295, %v327
    %v344 = vmul.f32 %v296, %v328
    %v345 = vmul.f32 %v91, %v329
    %v346 = vmul.f32 %v94, %v330
    %v347 = vmul.f32 %v97, %v331
    %v348 = vmul.f32 %v100, %v332
    %v349 = vmul.f32 %v103, %v333
    %v350 = vmul.f32 %v106, %v334
    %v351 = vmul.f32 %v109, %v335
    %v352 = vmul.f32 %v112, %v336
    %v353 = vmul.f32 %v115, %v337
    %v354 = vmul.f32 %v118, %v338
    %v355 = vmul.f32 %v121, %v339
    %v356 = vmul.f32 %v124, %v340
    %v357 = vmul.f32 %v127, %v341
    %v358 = vmul.f32 %v130, %v342
    %v359 = vmul.f32 %v133, %v343
    %v360 = vmul.f32 %v136, %v344
    %v361 = vmul.f32 %v345, 2.0
    %v362 = vmul.f32 %v346, 2.0
    %v363 = vmul.f32 %v347, 2.0
    %v364 = vmul.f32 %v348, 2.0
    %v365 = vmul.f32 %v349, 2.0
    %v366 = vmul.f32 %v350, 2.0
    %v367 = vmul.f32 %v351, 2.0
    %v368 = vmul.f32 %v352, 2.0
    %v369 = vmul.f32 %v353, 2.0
    %v370 = vmul.f32 %v354, 2.0
    %v371 = vmul.f32 %v355, 2.0
    %v372 = vmul.f32 %v356, 2.0
    %v373 = vmul.f32 %v357, 2.0
    %v374 = vmul.f32 %v358, 2.0
    %v375 = vmul.f32 %v359, 2.0
    %v376 = vmul.f32 %v360, 2.0
    %v393 = vlaneseq
    %v394 = vand.u32 %v393, 127
    %v395 = vlaneseq
    %v396 = vshrl.u32 %v395, 7
    %v397 = vsub.s32 %v394, %v396
    %v398 = vrot.slane %v361, %v397
    %v399 = vadd.s32 %v394, 4294967288
    %v400 = vlaneseq
    %v401 = vshrl.u32 %v400, 7
    %v402 = vsub.s32 %v399, %v401
    %v403 = vrot.slane %v362, %v402
    %vm404 = vcmask 130112
    %v405 = vsel %vm404, %v403, %v398
    %v406 = vadd.s32 %v394, 4294967280
    %v407 = vlaneseq
    %v408 = vshrl.u32 %v407, 7
    %v409 = vsub.s32 %v406, %v408
    %v410 = vrot.slane %v363, %v409
    %vm411 = vcmask 195712
    %v412 = vsel %vm411, %v410, %v405
    %v413 = vadd.s32 %v394, 4294967272
    %v414 = vlaneseq
    %v415 = vshrl.u32 %v414, 7
    %v416 = vsub.s32 %v413, %v415
    %v417 = vrot.slane %v364, %v416
    %vm418 = vcmask 261312
    %v419 = vsel %vm418, %v417, %v412
    %v420 = vadd.s32 %v394, 4294967264
    %v421 = vlaneseq
    %v422 = vshrl.u32 %v421, 7
    %v423 = vsub.s32 %v420, %v422
    %v424 = vrot.slane %v365, %v423
    %vm425 = vcmask 326912
    %v426 = vsel %vm425, %v424, %v419
    %v427 = vadd.s32 %v394, 4294967256
    %v428 = vlaneseq
    %v429 = vshrl.u32 %v428, 7
    %v430 = vsub.s32 %v427, %v429
    %v431 = vrot.slane %v366, %v430
    %vm432 = vcmask 392512
    %v433 = vsel %vm432, %v431, %v426
    %v434 = vadd.s32 %v394, 4294967248
    %v435 = vlaneseq
    %v436 = vshrl.u32 %v435, 7
    %v437 = vsub.s32 %v434, %v436
    %v438 = vrot.slane %v367, %v437
    %vm439 = vcmask 458112
    %v440 = vsel %vm439, %v438, %v433
    %v441 = vadd.s32 %v394, 4294967240
    %v442 = vlaneseq
    %v443 = vshrl.u32 %v442, 7
    %v444 = vsub.s32 %v441, %v443
    %v445 = vrot.slane %v368, %v444
    %vm446 = vcmask 523712
    %v447 = vsel %vm446, %v445, %v440
    %v448 = vadd.s32 %v394, 4294967232
    %v449 = vlaneseq
    %v450 = vshrl.u32 %v449, 7
    %v451 = vsub.s32 %v448, %v450
    %v452 = vrot.slane %v369, %v451
    %vm453 = vcmask 589312
    %v454 = vsel %vm453, %v452, %v447
    %v455 = vadd.s32 %v394, 4294967224
    %v456 = vlaneseq
    %v457 = vshrl.u32 %v456, 7
    %v458 = vsub.s32 %v455, %v457
    %v459 = vrot.slane %v370, %v458
    %vm460 = vcmask 654912
    %v461 = vsel %vm460, %v459, %v454
    %v462 = vadd.s32 %v394, 4294967216
    %v463 = vlaneseq
    %v464 = vshrl.u32 %v463, 7
    %v465 = vsub.s32 %v462, %v464
    %v466 = vrot.slane %v371, %v465
    %vm467 = vcmask 720512
    %v468 = vsel %vm467, %v466, %v461
    %v469 = vadd.s32 %v394, 4294967208
    %v470 = vlaneseq
    %v471 = vshrl.u32 %v470, 7
    %v472 = vsub.s32 %v469, %v471
    %v473 = vrot.slane %v372, %v472
    %vm474 = vcmask 786112
    %v475 = vsel %vm474, %v473, %v468
    %v476 = vadd.s32 %v394, 4294967200
    %v477 = vlaneseq
    %v478 = vshrl.u32 %v477, 7
    %v479 = vsub.s32 %v476, %v478
    %v480 = vrot.slane %v373, %v479
    %vm481 = vcmask 851712
    %v482 = vsel %vm481, %v480, %v475
    %v483 = vadd.s32 %v394, 4294967192
    %v484 = vlaneseq
    %v485 = vshrl.u32 %v484, 7
    %v486 = vsub.s32 %v483, %v485
    %v487 = vrot.slane %v374, %v486
    %vm488 = vcmask 917312
    %v489 = vsel %vm488, %v487, %v482
    %v490 = vadd.s32 %v394, 4294967184
    %v491 = vlaneseq
    %v492 = vshrl.u32 %v491, 7
    %v493 = vsub.s32 %v490, %v492
    %v494 = vrot.slane %v375, %v493
    %vm495 = vcmask 982912
    %v496 = vsel %vm495, %v494, %v489
    %v497 = vadd.s32 %v394, 4294967176
    %v498 = vlaneseq
    %v499 = vshrl.u32 %v498, 7
    %v500 = vsub.s32 %v497, %v499
    %v501 = vrot.slane %v376, %v500
    %vm502 = vcmask 1048512
    %v503 = vsel %vm502, %v501, %v496
    %505 = vst [vmem:[#allocation7] sm:$0x1] %v503
    // Predicated region
    $region18: #{tpu_custom_call.1} parent=1 // pred_check
      _
    $region19: #{tpu_custom_call.1} parent=1 // pred_check_branch
      %507 = sbr.rel (0) target = $region21
    $region20: #{tpu_custom_call.1} parent=1 // pred_region
      %s509 = ssub.s32 16, 16
      %510 = vsyncadd [#allocation4], %s509
      %s512 = sshll.u32 [#allocation7], 4
      %s513 = int_to_ptr.vmem [resolvable:$true] %s512
      %515 = dma.vmem_to_hbm [thread:$0]  %s513, 16, %s2, [#allocation4]
    $region21: #{tpu_custom_call.1} parent=1 // pred_fallthru
      _
    // Predicated region
    $region22: #{tpu_custom_call.1} parent=1 // pred_check
      _
    $region23: #{tpu_custom_call.1} parent=1 // pred_check_branch
      %517 = sbr.rel (0) target = $region25
    $region24: #{tpu_custom_call.1} parent=1 // pred_region
      %518 = dma.done [#allocation4], 16
    $region25: #{tpu_custom_call.1} parent=1 // pred_fallthru
      _
    %519 = vsyncpa [#allocation3], 1
    %520 = vsyncpa [#allocation6], 1
    %521 = vsyncpa [#allocation4], 1

</llo_original>
